<compile_context>
chip_gen: v5e
topology: v5e:2x2
jax: 0.10.0
libtpu: 0.0.40
codegen_flags: <defaults>
</compile_context>

<pallas_src>
import numpy as np
import jax
import jax.numpy as jnp
from jax.experimental import pallas as pl
from jax.experimental.pallas import tpu as pltpu

LANES = 128
SUBLANES = 8
NUM_CORES = 2                       # parallel grid axis; no-op split on v5e/v6e
VMEM_BUDGET = 24 * 1024 * 1024      # per-core double-buffered working-set cap
VMEM_LIMIT = 28 * 1024 * 1024       # scoped-VMEM limit handed to Mosaic


def _ceil_div(a, b):
    return -(-a // b)


def _round_up(a, b):
    return _ceil_div(a, b) * b


# ----------------------------------------------------------------------------
# __init__ glue (host-side, deterministic): synthetic mask + level weights
# ----------------------------------------------------------------------------
def generate_trajectory_mask(C, K, X, Y):
    """Synthetic deterministic 'Black Sea' mask (1, C, K, X, Y); sea area
    shrinks with depth (channel index), constant over batch and K."""
    # TODO(synk): real generate_trajectory_mask reads bathymetry data; synthesized here.
    xx, yy = np.meshgrid(np.arange(X), np.arange(Y), indexing="ij")
    mask = np.zeros((1, C, K, X, Y), dtype=np.float32)
    for c in range(C):
        sea = ((xx + yy) < (X + Y - 2 - 3 * c)).astype(np.float32)
        mask[0, c] = sea[None]
    return mask


def compute_level_weights(mask):
    """Numpy port of the PyTorch compute_level_weights."""
    pixels_total = mask.sum(axis=(1, 3, 4))[0, 0]
    pixels_per_layer = mask.sum(axis=(3, 4))[0, :, 0] / pixels_total
    pmin, pmax = pixels_per_layer.min(), pixels_per_layer.max()
    with np.errstate(divide="ignore", invalid="ignore"):
        norm = (pixels_per_layer - pmin) / (pmax - pmin)
    weights_per_layer = 1.0 + (1.0 - norm)
    if np.isnan(weights_per_layer).any():
        weights_per_layer = np.ones_like(weights_per_layer)
    weights_per_layer = weights_per_layer[None, :, None, None, None]
    _, C, K, X, Y = mask.shape
    return np.broadcast_to(weights_per_layer, (1, C, K, X, Y)).astype(np.float32)


# ----------------------------------------------------------------------------
# Pallas kernel: per-(core, batch) partial SSE of w_n * (xd - x)^2
#   (w_n already contains the mask, i.e. w_n == 0 off-sea / in padding)
# ----------------------------------------------------------------------------
def make_loss_kernel(B, tile_rows):
    groups = tile_rows // SUBLANES

    def kernel(x_ref, xd_ref, m_ref, s_ref, o_ref):
        step = pl.program_id(1)

        @pl.when(step == 0)
        def _():
            o_ref[...] = jnp.zeros_like(o_ref)

        # (B, TR, 128) lane/sublane-dense tiles; upcast in-kernel (bf16-friendly).
        x = x_ref[...].astype(jnp.float32)
        xd = xd_ref[...].astype(jnp.float32)
        # Reconstruct w = mask * per-row channel weight (lossless: mask is {0,1}).
        w = m_ref[...].astype(jnp.float32) * s_ref[...]          # (1, TR, 128)
        d = xd - x
        prod = w * d * d                                          # (B, TR, 128)
        # Compact accumulation: fold TR sublane-groups into 8 sublanes with
        # tile-aligned reshape + vreg-wise VALU adds (no XLU, no big scratch).
        part = jnp.sum(prod.reshape(B, groups, SUBLANES, LANES), axis=1)
        o_ref[...] += part.reshape(1, B, SUBLANES, LANES)

    return kernel


def poseidon_partial_sse(x, xd, w_mask, w_scale, tile_rows):
    B, r_pad, lanes = x.shape
    assert lanes == LANES
    assert (r_pad // NUM_CORES) % tile_rows == 0
    steps = (r_pad // NUM_CORES) // tile_rows
    grid = (NUM_CORES, steps)

    def rmap(c, i):                      # block-row index for core c, step i
        return c * steps + i

    return pl.pallas_call(
        make_loss_kernel(B, tile_rows),
        out_shape=jax.ShapeDtypeStruct((NUM_CORES, B, SUBLANES, LANES),
                                       jnp.float32),
        grid_spec=pltpu.PrefetchScalarGridSpec(
            num_scalar_prefetch=0,
            grid=grid,
            in_specs=[
                pl.BlockSpec((B, tile_rows, LANES), lambda c, i: (0, rmap(c, i), 0)),  # x_0
                pl.BlockSpec((B, tile_rows, LANES), lambda c, i: (0, rmap(c, i), 0)),  # x_0_denoised
                pl.BlockSpec((1, tile_rows, LANES), lambda c, i: (0, rmap(c, i), 0)),  # mask (bf16) or full w (f32)
                pl.BlockSpec((1, tile_rows, 1), lambda c, i: (0, rmap(c, i), 0)),      # per-row channel scale
            ],
            # Each core owns its own output block (no write hazard across the
            # parallel axis); same block across the "arbitrary" axis => resident
            # accumulator, written back to HBM once.
            out_specs=pl.BlockSpec((1, B, SUBLANES, LANES),
                                   lambda c, i: (c, 0, 0, 0)),
        ),
        compiler_params=pltpu.CompilerParams(
            dimension_semantics=("parallel", "arbitrary"),
            vmem_limit_bytes=VMEM_LIMIT),
    )(x, xd, w_mask, w_scale)


# ----------------------------------------------------------------------------
# Module wrapper
# ----------------------------------------------------------------------------
class PoseidonLossPallas:
    def __init__(self, C, K, X, Y, use_mask=True, max_tile_rows=2048,
                 batch_hint=2):
        mask = generate_trajectory_mask(C, K, X, Y)               # (1,C,K,X,Y)
        wl = compute_level_weights(mask)                          # (1,C,K,X,Y)
        wl_per_channel = np.array(wl[0, :, 0, 0, 0], dtype=np.float32)  # (C,)
        mask_flat = mask.reshape(1, -1).astype(np.float32)        # (1, N)
        wl_flat = wl.reshape(1, -1).astype(np.float32)            # (1, N)
        N = mask_flat.shape[1]

        self.use_mask = use_mask
        base = mask_flat if use_mask else np.ones_like(mask_flat)
        self.n_valid = int(base.sum())
        self.idx = np.nonzero(mask_flat[0] == 1.0)[0] if use_mask else None
        self._wl_ref = jnp.asarray(
            wl_flat[:, self.idx] if use_mask else wl_flat)        # reference only

        # ---- lane/sublane-dense tiling: N -> (rows, 128), rows split 2 cores
        rows = _ceil_div(N, LANES)
        rpc = _ceil_div(rows, NUM_CORES)
        elems_per_channel = K * X * Y
        aligned = (elems_per_channel % LANES == 0)
        w_bytes = 2 if aligned else 4
        # tile_rows: multiple of 16, capped by max_tile_rows and by the
        # per-core double-buffered VMEM budget (x + xd + w + scale, 2 buffers).
        per_row = 2 * (2 * batch_hint * LANES * 4 + LANES * w_bytes + 4)
        tr_cap = max(16, (VMEM_BUDGET // per_row) // 16 * 16)
        tile_rows = min(max_tile_rows, _round_up(rpc, 16), tr_cap)
        tile_rows = max(16, (tile_rows // 16) * 16)
        rpc_pad = _round_up(rpc, tile_rows)
        r_pad = NUM_CORES * rpc_pad

        self.N = N
        self.rows = rows
        self.r_pad = r_pad
        self.tile_rows = tile_rows
        self.n_pad = r_pad * LANES - N

        base_pad = np.pad(base, ((0, 0), (0, self.n_pad)))        # zero padding
        if aligned:
            # Lossless compact encoding: bf16 {0,1} mask streamed from HBM plus
            # a tiny per-row f32 channel weight; w is rebuilt in-kernel.
            rows_per_channel = elems_per_channel // LANES
            scale = np.zeros((r_pad,), dtype=np.float32)
            ch = np.minimum(np.arange(rows) // rows_per_channel, C - 1)
            scale[:rows] = wl_per_channel[ch]
            self.w_mask = jnp.asarray(base_pad.reshape(1, r_pad, LANES),
                                      dtype=jnp.bfloat16)
            self.w_scale = jnp.asarray(scale.reshape(1, r_pad, 1),
                                       dtype=jnp.float32)
        else:
            # Fallback: stream the full f32 mask*level-weight tensor; the
            # per-row scale degenerates to ones (same kernel either way).
            w_eff = (wl_flat * base).astype(np.float32)
            w_eff = np.pad(w_eff, ((0, 0), (0, self.n_pad)))
            self.w_mask = jnp.asarray(w_eff.reshape(1, r_pad, LANES),
                                      dtype=jnp.float32)
            self.w_scale = jnp.ones((1, r_pad, 1), dtype=jnp.float32)

        self._fn = jax.jit(self._forward)

    # pad + reshape + pallas_call + tiny epilogue, all fused under jit
    def _forward(self, x_0, x_0_denoised, sigma_t):
        B = x_0.shape[0]
        x, xd = x_0, x_0_denoised
        if self.n_pad:
            pad = ((0, 0), (0, self.n_pad))
            x = jnp.pad(x, pad)
            xd = jnp.pad(xd, pad)
        x = x.reshape(B, self.r_pad, LANES)
        xd = xd.reshape(B, self.r_pad, LANES)
        partial = poseidon_partial_sse(x, xd, self.w_mask, self.w_scale,
                                       self.tile_rows)             # (2,B,8,128)
        sse = jnp.sum(partial, axis=(0, 2, 3))                     # (B,)
        mse = sse * jnp.float32(1.0 / self.n_valid)                # masked mean
        weight = 1.0 + 1.0 / (sigma_t[:, 0].astype(jnp.float32) ** 2)
        return jnp.mean(weight * mse)

    def __call__(self, x_0, x_0_denoised, sigma_t):
        return self._fn(x_0, x_0_denoised, sigma_t)

    def reference(self, x_0, x_0_denoised, sigma_t):
        """Pure-JAX reference mirroring the PyTorch forward (uses the gather)."""
        if self.use_mask:
            idx = jnp.asarray(self.idx)
            x_0 = jnp.take(x_0, idx, axis=1)
            x_0_denoised = jnp.take(x_0_denoised, idx, axis=1)
        weight = 1.0 + 1.0 / sigma_t ** 2
        se = self._wl_ref * (x_0_denoised - x_0) ** 2
        mse = jnp.mean(se, axis=-1, keepdims=True)
        return jnp.mean(weight * mse)


# ----------------------------------------------------------------------------
if __name__ == "__main__":
    B, C, K, X, Y = 2, 4, 8, 16, 16
    N = C * K * X * Y   # 8192 -> 64 rows of 128; 32 rows per core, grid=(2, 1)

    loss_mod = PoseidonLossPallas(C, K, X, Y, use_mask=True, batch_hint=B)

    key = jax.random.PRNGKey(0)
    k1, k2, k3 = jax.random.split(key, 3)
    x_0 = jax.random.normal(k1, (B, N), dtype=jnp.float32)
    x_0_denoised = x_0 + 0.1 * jax.random.normal(k2, (B, N), dtype=jnp.float32)
    sigma_t = jax.random.uniform(k3, (B, 1), dtype=jnp.float32,
                                 minval=0.5, maxval=2.0)

    loss = jax.block_until_ready(loss_mod(x_0, x_0_denoised, sigma_t))
    ref = jax.block_until_ready(loss_mod.reference(x_0, x_0_denoised, sigma_t))
    assert np.allclose(np.asarray(loss), np.asarray(ref),
                       rtol=1e-4, atol=1e-6), (float(loss), float(ref))

    print("KERNEL_OK")
</pallas_src>

<mosaic_0001>
module attributes {stable_mosaic.version = 11 : i64} {
  func.func @kernel(%arg0: i32, %arg1: i32, %arg2: memref<2x32x128xf32, #tpu.memory_space<vmem>>, %arg3: memref<2x32x128xf32, #tpu.memory_space<vmem>>, %arg4: memref<1x32x128xbf16, #tpu.memory_space<vmem>>, %arg5: memref<1x32x1xf32, #tpu.memory_space<vmem>>, %arg6: memref<1x2x8x128xf32, #tpu.memory_space<vmem>>) attributes {dimension_semantics = [#tpu.dimension_semantics<parallel>, #tpu.dimension_semantics<arbitrary>], iteration_bounds = array<i64: 2, 1>, scalar_prefetch = 0 : i64, scratch_operands = 0 : i64, tpu.core_type = #tpu.core_type<tc>, window_params = [{transform_indices = @transform_0, window_bounds = array<i64: 2, 32, 128>}, {transform_indices = @transform_1, window_bounds = array<i64: 2, 32, 128>}, {transform_indices = @transform_2, window_bounds = array<i64: 1, 32, 128>}, {transform_indices = @transform_3, window_bounds = array<i64: 1, 32, 1>}, {transform_indices = @transform_4, window_bounds = array<i64: 1, 2, 8, 128>}]} {
    %c0_i32 = arith.constant 0 : i32
    %0 = arith.cmpi eq, %arg1, %c0_i32 : i32
    %1 = arith.extui %0 : i1 to i32
    %c0_i32_0 = arith.constant 0 : i32
    %2 = arith.cmpi ne, %1, %c0_i32_0 : i32
    scf.if %2 {
      %cst_20 = arith.constant 0.000000e+00 : f32
      %20 = vector.broadcast %cst_20 : f32 to vector<1x2x8x128xf32>
      %c0_21 = arith.constant 0 : index
      %c0_22 = arith.constant 0 : index
      %c0_23 = arith.constant 0 : index
      %c0_24 = arith.constant 0 : index
      %21 = vector.load %arg6[%c0_21, %c0_22, %c0_23, %c0_24] : memref<1x2x8x128xf32, #tpu.memory_space<vmem>>, vector<1x2x8x128xf32>
      tpu.vector_store %arg6[%c0_21, %c0_22, %c0_23, %c0_24], %20 {strides = array<i32>} : memref<1x2x8x128xf32, #tpu.memory_space<vmem>>, vector<1x2x8x128xf32>,
    } else {
    }
    %c0 = arith.constant 0 : index
    %c0_1 = arith.constant 0 : index
    %c0_2 = arith.constant 0 : index
    %3 = vector.load %arg2[%c0, %c0_1, %c0_2] : memref<2x32x128xf32, #tpu.memory_space<vmem>>, vector<2x32x128xf32>
    %c0_3 = arith.constant 0 : index
    %c0_4 = arith.constant 0 : index
    %c0_5 = arith.constant 0 : index
    %4 = vector.load %arg3[%c0_3, %c0_4, %c0_5] : memref<2x32x128xf32, #tpu.memory_space<vmem>>, vector<2x32x128xf32>
    %c0_6 = arith.constant 0 : index
    %c0_7 = arith.constant 0 : index
    %c0_8 = arith.constant 0 : index
    %5 = vector.load %arg4[%c0_6, %c0_7, %c0_8] : memref<1x32x128xbf16, #tpu.memory_space<vmem>>, vector<1x32x128xbf16>
    %6 = arith.extf %5 : vector<1x32x128xbf16> to vector<1x32x128xf32>
    %c0_9 = arith.constant 0 : index
    %c0_10 = arith.constant 0 : index
    %c0_11 = arith.constant 0 : index
    %7 = vector.load %arg5[%c0_9, %c0_10, %c0_11] : memref<1x32x1xf32, #tpu.memory_space<vmem>>, vector<1x32x1xf32>
    %8 = vector.broadcast %7 : vector<1x32x1xf32> to vector<1x32x128xf32>
    %9 = arith.mulf %6, %8 : vector<1x32x128xf32>
    %10 = arith.subf %4, %3 : vector<2x32x128xf32>
    %11 = vector.broadcast %9 : vector<1x32x128xf32> to vector<2x32x128xf32>
    %12 = arith.mulf %11, %10 : vector<2x32x128xf32>
    %13 = arith.mulf %12, %10 : vector<2x32x128xf32>
    %14 = vector.shape_cast %13 : vector<2x32x128xf32> to vector<2x4x8x128xf32>
    %cst = arith.constant dense<0.000000e+00> : vector<2x8x128xf32>
    %15 = vector.multi_reduction <add>, %14, %cst [1] : vector<2x4x8x128xf32> to vector<2x8x128xf32>
    %c0_12 = arith.constant 0 : index
    %c0_13 = arith.constant 0 : index
    %c0_14 = arith.constant 0 : index
    %c0_15 = arith.constant 0 : index
    %16 = vector.load %arg6[%c0_12, %c0_13, %c0_14, %c0_15] : memref<1x2x8x128xf32, #tpu.memory_space<vmem>>, vector<1x2x8x128xf32>
    %17 = vector.shape_cast %15 : vector<2x8x128xf32> to vector<1x2x8x128xf32>
    %18 = arith.addf %16, %17 : vector<1x2x8x128xf32>
    %c0_16 = arith.constant 0 : index
    %c0_17 = arith.constant 0 : index
    %c0_18 = arith.constant 0 : index
    %c0_19 = arith.constant 0 : index
    %19 = vector.load %arg6[%c0_16, %c0_17, %c0_18, %c0_19] : memref<1x2x8x128xf32, #tpu.memory_space<vmem>>, vector<1x2x8x128xf32>
    tpu.vector_store %arg6[%c0_16, %c0_17, %c0_18, %c0_19], %18 {strides = array<i32>} : memref<1x2x8x128xf32, #tpu.memory_space<vmem>>, vector<1x2x8x128xf32>,
    return
  }
  func.func @transform_0(%arg0: i32, %arg1: i32) -> (i32, i32, i32) {
    %c1_i32 = arith.constant 1 : i32
    %0 = arith.muli %arg0, %c1_i32 : i32
    %1 = arith.addi %0, %arg1 : i32
    %c0_i32 = arith.constant 0 : i32
    %c0_i32_0 = arith.constant 0 : i32
    %c0_i32_1 = arith.constant 0 : i32
    return %c0_i32, %1, %c0_i32_0 : i32, i32, i32
  }
  func.func @transform_1(%arg0: i32, %arg1: i32) -> (i32, i32, i32) {
    %c1_i32 = arith.constant 1 : i32
    %0 = arith.muli %arg0, %c1_i32 : i32
    %1 = arith.addi %0, %arg1 : i32
    %c0_i32 = arith.constant 0 : i32
    %c0_i32_0 = arith.constant 0 : i32
    %c0_i32_1 = arith.constant 0 : i32
    return %c0_i32, %1, %c0_i32_0 : i32, i32, i32
  }
  func.func @transform_2(%arg0: i32, %arg1: i32) -> (i32, i32, i32) {
    %c1_i32 = arith.constant 1 : i32
    %0 = arith.muli %arg0, %c1_i32 : i32
    %1 = arith.addi %0, %arg1 : i32
    %c0_i32 = arith.constant 0 : i32
    %c0_i32_0 = arith.constant 0 : i32
    %c0_i32_1 = arith.constant 0 : i32
    return %c0_i32, %1, %c0_i32_0 : i32, i32, i32
  }
  func.func @transform_3(%arg0: i32, %arg1: i32) -> (i32, i32, i32) {
    %c1_i32 = arith.constant 1 : i32
    %0 = arith.muli %arg0, %c1_i32 : i32
    %1 = arith.addi %0, %arg1 : i32
    %c0_i32 = arith.constant 0 : i32
    %c0_i32_0 = arith.constant 0 : i32
    %c0_i32_1 = arith.constant 0 : i32
    return %c0_i32, %1, %c0_i32_0 : i32, i32, i32
  }
  func.func @transform_4(%arg0: i32, %arg1: i32) -> (i32, i32, i32, i32) {
    %c0_i32 = arith.constant 0 : i32
    %c0_i32_0 = arith.constant 0 : i32
    %c0_i32_1 = arith.constant 0 : i32
    %c0_i32_2 = arith.constant 0 : i32
    return %arg0, %c0_i32, %c0_i32_0, %c0_i32_1 : i32, i32, i32, i32
  }
}

</mosaic_0001>

<llo_original>
// kernel: _forward.1
$region0: #{_forward.1}
  #allocation0 [shape = 'u32[]', space=smem, size = 0x4, offset = 0x4, fixed_abs, tag = 'smem constant byte address 0x4 - core index']
  #allocation1 [shape = 'u32[72,128]{1,0:T(1,128)}', space=vmem, size = 0x9000, scoped, tag = 'internal scratch']
  %s0 = inlined_call_operand.vmem [shape: f32[2,64,128], index: 0, kind: input, shape index: {}]
  %s1 = inlined_call_operand.vmem [shape: f32[2,64,128], index: 1, kind: input, shape index: {}]
  %s2 = inlined_call_operand.vmem [shape: bf16[1,64,128], index: 2, kind: input, shape index: {}]
  %s3 = inlined_call_operand.vmem [shape: f32[1,64,1], index: 3, kind: input, shape index: {}]
  %s4 = inlined_call_operand.vmem [shape: f32[2,2,8,128], index: 4, kind: output, shape index: {}]
  %s5 = sld [smem:[#allocation0]]
  $region129: #{_forward.1} parent=0
    _
  %s7 = ssub.s32 1, %s5
  %s8 = scalar_select 0, %s7, %s5
  $region1: #{_forward.1} parent=0
    #allocation2 [shape = 'u8[65536]{0}', space=vmem, size = 0x10000, scoped, tag = 'input window, operand 0']
    #allocation3 [shape = 'u8[65536]{0}', space=vmem, size = 0x10000, scoped, tag = 'input window, operand 1']
    loop: start=0, step=1, limit=4
    $region2: #{_forward.1} parent=1 // loop_pre_header
      _
    $region3: #{_forward.1} parent=1 // loop_header
      %s10 = sphi 0, %s14
      %p11 = scmp.ge.s32.totalorder %s10, 4
      %s17 = sphi 0, %s29
      %s18 = sphi 0, %s25
      %s19 = sphi 0, %s17
      %s20 = sphi 0, %s18
      %s21 = sphi 0, %s19
      %s22 = sphi 0, %s20
      %s34 = sphi 0, %s36
      %s37 = sphi 0, %s34
      %s38 = sphi 0, %s37
      %s54 = sphi 0, %s38
      %s62 = sphi 0, %s64
      %s65 = sphi 0, %s62
      %s66 = sphi 0, %s65
      %s82 = sphi 0, %s66
      %s90 = sphi 0, %s92
      %s93 = sphi 0, %s90
      %s94 = sphi 0, %s93
      %s110 = sphi 0, %s94
      %s118 = sphi 0, %s120
      %s121 = sphi 0, %s118
      %s122 = sphi 0, %s121
      %s138 = sphi 0, %s122
      %s144 = sphi 0, %s146
      %s147 = sphi 0, %s144
      %s148 = sphi 0, %s147
      %s164 = sphi 0, %s148
    $region4: #{_forward.1} parent=1 // loop_header_branch
      %13 = sbr.rel (%p11) target = $region8
    $region5: #{_forward.1} parent=1 // loop_body
      %s15 = ssub.s32 %s10, 1
      %s16 = ssub.s32 %s10, 2
      %s23 = sadd.s32 1, %s18
      %p24 = scmp.ge.s32.totalorder %s23, 1
      %s25 = scalar_select %p24, 0, %s23
      %s26 = sadd.s32 1, %s17
      %s27 = scalar_select %p24, %s26, %s17
      %p28 = scmp.ge.s32.totalorder %s27, 2
      %s29 = scalar_select %p28, 0, %s27
      %s30 = sadd.s32 %s17, %s18
      %s31 = sadd.s32 %s29, %s25
      %s32 = ssub.s32 %s30, %s31
      %p33 = scmp.eq.s32.totalorder %s32, 0
      %s35 = sadd.s32 %s34, 1
      %s36 = scalar_select %p33, %s34, %s35
      %p39 = pneg %p33
      %p40 = scmp.eq.s32.totalorder %s10, 1
      %p41 = por %p39, %p40
      %p42 = scmp.ne.s32.totalorder %s34, %s37
      %p43 = scmp.eq.s32.totalorder %s10, 0
      %p44 = por %p42, %p43
      %p45 = scmp.ne.s32.totalorder %s34, %s37
      %p46 = scmp.eq.s32.totalorder %s15, 1
      %p47 = por %p45, %p46
      %p48 = scmp.ne.s32.totalorder %s37, %s38
      %p49 = scmp.eq.s32.totalorder %s15, 0
      %p50 = por %p48, %p49
      %p51 = scmp.ne.s32.totalorder %s37, %s38
      %p52 = scmp.eq.s32.totalorder %s16, 1
      %p53 = por %p51, %p52
      %p55 = scmp.ne.s32.totalorder %s38, %s54
      %p56 = scmp.eq.s32.totalorder %s16, 0
      %p57 = por %p55, %p56
      %s58 = sadd.s32 %s17, %s18
      %s59 = sadd.s32 %s29, %s25
      %s60 = ssub.s32 %s58, %s59
      %p61 = scmp.eq.s32.totalorder %s60, 0
      %s63 = sadd.s32 %s62, 1
      %s64 = scalar_select %p61, %s62, %s63
      %p67 = pneg %p61
      %p68 = scmp.eq.s32.totalorder %s10, 1
      %p69 = por %p67, %p68
      %p70 = scmp.ne.s32.totalorder %s62, %s65
      %p71 = scmp.eq.s32.totalorder %s10, 0
      %p72 = por %p70, %p71
      %p73 = scmp.ne.s32.totalorder %s62, %s65
      %p74 = scmp.eq.s32.totalorder %s15, 1
      %p75 = por %p73, %p74
      %p76 = scmp.ne.s32.totalorder %s65, %s66
      %p77 = scmp.eq.s32.totalorder %s15, 0
      %p78 = por %p76, %p77
      %p79 = scmp.ne.s32.totalorder %s65, %s66
      %p80 = scmp.eq.s32.totalorder %s16, 1
      %p81 = por %p79, %p80
      %p83 = scmp.ne.s32.totalorder %s66, %s82
      %p84 = scmp.eq.s32.totalorder %s16, 0
      %p85 = por %p83, %p84
      %s86 = sadd.s32 %s17, %s18
      %s87 = sadd.s32 %s29, %s25
      %s88 = ssub.s32 %s86, %s87
      %p89 = scmp.eq.s32.totalorder %s88, 0
      %s91 = sadd.s32 %s90, 1
      %s92 = scalar_select %p89, %s90, %s91
      %p95 = pneg %p89
      %p96 = scmp.eq.s32.totalorder %s10, 1
      %p97 = por %p95, %p96
      %p98 = scmp.ne.s32.totalorder %s90, %s93
      %p99 = scmp.eq.s32.totalorder %s10, 0
      %p100 = por %p98, %p99
      %p101 = scmp.ne.s32.totalorder %s90, %s93
      %p102 = scmp.eq.s32.totalorder %s15, 1
      %p103 = por %p101, %p102
      %p104 = scmp.ne.s32.totalorder %s93, %s94
      %p105 = scmp.eq.s32.totalorder %s15, 0
      %p106 = por %p104, %p105
      %p107 = scmp.ne.s32.totalorder %s93, %s94
      %p108 = scmp.eq.s32.totalorder %s16, 1
      %p109 = por %p107, %p108
      %p111 = scmp.ne.s32.totalorder %s94, %s110
      %p112 = scmp.eq.s32.totalorder %s16, 0
      %p113 = por %p111, %p112
      %s114 = sadd.s32 %s17, %s18
      %s115 = sadd.s32 %s29, %s25
      %s116 = ssub.s32 %s114, %s115
      %p117 = scmp.eq.s32.totalorder %s116, 0
      %s119 = sadd.s32 %s118, 1
      %s120 = scalar_select %p117, %s118, %s119
      %p123 = pneg %p117
      %p124 = scmp.eq.s32.totalorder %s10, 1
      %p125 = por %p123, %p124
      %p126 = scmp.ne.s32.totalorder %s118, %s121
      %p127 = scmp.eq.s32.totalorder %s10, 0
      %p128 = por %p126, %p127
      %p129 = scmp.ne.s32.totalorder %s118, %s121
      %p130 = scmp.eq.s32.totalorder %s15, 1
      %p131 = por %p129, %p130
      %p132 = scmp.ne.s32.totalorder %s121, %s122
      %p133 = scmp.eq.s32.totalorder %s15, 0
      %p134 = por %p132, %p133
      %p135 = scmp.ne.s32.totalorder %s121, %s122
      %p136 = scmp.eq.s32.totalorder %s16, 1
      %p137 = por %p135, %p136
      %p139 = scmp.ne.s32.totalorder %s122, %s138
      %p140 = scmp.eq.s32.totalorder %s16, 0
      %p141 = por %p139, %p140
      %s142 = ssub.s32 %s17, %s29
      %p143 = scmp.eq.s32.totalorder %s142, 0
      %s145 = sadd.s32 %s144, 1
      %s146 = scalar_select %p143, %s144, %s145
      %p149 = pneg %p143
      %p150 = scmp.eq.s32.totalorder %s10, 1
      %p151 = por %p149, %p150
      %p152 = scmp.ne.s32.totalorder %s144, %s147
      %p153 = scmp.eq.s32.totalorder %s10, 0
      %p154 = por %p152, %p153
      %p155 = scmp.ne.s32.totalorder %s144, %s147
      %p156 = scmp.eq.s32.totalorder %s15, 1
      %p157 = por %p155, %p156
      %p158 = scmp.ne.s32.totalorder %s147, %s148
      %p159 = scmp.eq.s32.totalorder %s15, 0
      %p160 = por %p158, %p159
      %p161 = scmp.ne.s32.totalorder %s147, %s148
      %p162 = scmp.eq.s32.totalorder %s16, 1
      %p163 = por %p161, %p162
      %p165 = scmp.ne.s32.totalorder %s148, %s164
      %p166 = scmp.eq.s32.totalorder %s16, 0
      %p167 = por %p165, %p166
      %p168 = scmp.le.s32.totalorder 1, %s10
      %p169 = scmp.lt.s32.totalorder %s10, 3
      %p170 = pnand %p168, %p169
      %p171 = pneg %p170
      // Predicated region
      $region9: #{_forward.1} parent=5 // pred_check
        _
      $region10: #{_forward.1} parent=5 // pred_check_branch
        %173 = sbr.rel (%p170) target = $region12
      $region11: #{_forward.1} parent=5 // pred_region
        %s174 = ssub.s32 %s10, 1
      $region12: #{_forward.1} parent=5 // pred_fallthru
        _
      %p175 = scmp.lt.s32.totalorder %s10, 2
      // Predicated region
      $region13: #{_forward.1} parent=5 // pred_check
        %p176 = pneg %p175
      $region14: #{_forward.1} parent=5 // pred_check_branch
        %178 = sbr.rel (%p176) target = $region16
      $region15: #{_forward.1} parent=5 // pred_region
        // Predicated region
        $region17: #{_forward.1} parent=15 // pred_check
          %p179 = pneg %p44
        $region18: #{_forward.1} parent=15 // pred_check_branch
          %181 = sbr.rel (%p179) target = $region20
        $region19: #{_forward.1} parent=15 // pred_region
          %s182 = sand.u32 %s34, 1
          %s183 = sand.u32 %s34, 1
          %s184 = smul.addr %s183, 64
          %s185 = scalar_lea.vmem [#allocation2], %s184
          %s186 = sadd.s32 %s17, %s18
          %s187 = smul.u32 4, %s186
          %s188 = smul.addr %s187, 8
          %s189 = scalar_lea.vmem %s0, %s188
          // Predicated region
          $region21: #{_forward.1} parent=19 // pred_check
            _
          $region22: #{_forward.1} parent=19 // pred_check_branch
            %191 = sbr.rel (0) target = $region24
          $region23: #{_forward.1} parent=19 // pred_region
            // Predicated region
            $region25: #{_forward.1} parent=23 // pred_check
              _
            $region26: #{_forward.1} parent=23 // pred_check_branch
              %193 = sbr.rel (0) target = $region28
            $region27: #{_forward.1} parent=23 // pred_region
              // Predicated region
              $region40: #{_forward.1} parent=27 // pred_check
                _
              $region41: #{_forward.1} parent=27 // pred_check_branch
                %223 = sbr.rel (0) target = $region43
              $region42: #{_forward.1} parent=27 // pred_region
                loop: start=0, step=1, limit=1
                $region44: #{_forward.1} parent=42 // loop_pre_header
                  _
                $region45: #{_forward.1} parent=42 // loop_header
                  %s225 = sphi 0, %s229
                  %p226 = scmp.ge.s32.totalorder %s225, 1
                  %s230 = sphi %s189, %s189
                  %s231 = sphi %s185, %s185
                $region46: #{_forward.1} parent=42 // loop_header_branch
                  %228 = sbr.rel (%p226) target = $region50
                $region47: #{_forward.1} parent=42 // loop_body
                  %v232 = vld [vmem:[%s230] sm:$0xff]
                  %233 = vst [vmem:[%s231] sm:$0xff] %v232
                  %v234 = vld [vmem:[%s230 + $0x8] sm:$0xff]
                  %235 = vst [vmem:[%s231 + $0x8] sm:$0xff] %v234
                  %v236 = vld [vmem:[%s230 + $0x10] sm:$0xff]
                  %237 = vst [vmem:[%s231 + $0x10] sm:$0xff] %v236
                  %v238 = vld [vmem:[%s230 + $0x18] sm:$0xff]
                  %239 = vst [vmem:[%s231 + $0x18] sm:$0xff] %v238
                  %v240 = vld [vmem:[%s230 + $0x40] sm:$0xff]
                  %241 = vst [vmem:[%s231 + $0x20] sm:$0xff] %v240
                  %v242 = vld [vmem:[%s230 + $0x48] sm:$0xff]
                  %243 = vst [vmem:[%s231 + $0x28] sm:$0xff] %v242
                  %v244 = vld [vmem:[%s230 + $0x50] sm:$0xff]
                  %245 = vst [vmem:[%s231 + $0x30] sm:$0xff] %v244
                  %v246 = vld [vmem:[%s230 + $0x58] sm:$0xff]
                  %247 = vst [vmem:[%s231 + $0x38] sm:$0xff] %v246
                $region48: #{_forward.1} parent=42 // loop_footer
                  %s229 = sadd.s32 1, %s225
                $region49: #{_forward.1} parent=42 // loop_footer_branch
                  %224 = sbr.rel target = $region45
                $region50: #{_forward.1} parent=42 // loop_exit
                  _
              $region43: #{_forward.1} parent=27 // pred_fallthru
                _
              // Predicated region
              $region51: #{_forward.1} parent=27 // pred_check
                _
              $region52: #{_forward.1} parent=27 // pred_check_branch
                %249 = sbr.rel target = $region54
              $region53: #{_forward.1} parent=27 // pred_region
                _
              $region54: #{_forward.1} parent=27 // pred_fallthru
                _
            $region28: #{_forward.1} parent=23 // pred_fallthru
              _
            // Predicated region
            $region29: #{_forward.1} parent=23 // pred_check
              _
            $region30: #{_forward.1} parent=23 // pred_check_branch
              %195 = sbr.rel target = $region32
            $region31: #{_forward.1} parent=23 // pred_region
              %s197 = ssub.s32 256, 1
              loop: start=0, step=1, limit=1
              $region33: #{_forward.1} parent=31 // loop_pre_header
                _
              $region34: #{_forward.1} parent=31 // loop_header
                %s199 = sphi 0, %s203
                %p200 = scmp.ge.s32.totalorder %s199, 1
                %s204 = sphi %s189, %s189
                %s205 = sphi %s185, %s185
              $region35: #{_forward.1} parent=31 // loop_header_branch
                %202 = sbr.rel (%p200) target = $region39
              $region36: #{_forward.1} parent=31 // loop_body
                %v206 = vld [vmem:[%s204] sm:%s197]
                %207 = vst [vmem:[%s205] sm:%s197] %v206
                %v208 = vld [vmem:[%s204 + $0x8] sm:%s197]
                %209 = vst [vmem:[%s205 + $0x8] sm:%s197] %v208
                %v210 = vld [vmem:[%s204 + $0x10] sm:%s197]
                %211 = vst [vmem:[%s205 + $0x10] sm:%s197] %v210
                %v212 = vld [vmem:[%s204 + $0x18] sm:%s197]
                %213 = vst [vmem:[%s205 + $0x18] sm:%s197] %v212
                %v214 = vld [vmem:[%s204 + $0x40] sm:%s197]
                %215 = vst [vmem:[%s205 + $0x20] sm:%s197] %v214
                %v216 = vld [vmem:[%s204 + $0x48] sm:%s197]
                %217 = vst [vmem:[%s205 + $0x28] sm:%s197] %v216
                %v218 = vld [vmem:[%s204 + $0x50] sm:%s197]
                %219 = vst [vmem:[%s205 + $0x30] sm:%s197] %v218
                %v220 = vld [vmem:[%s204 + $0x58] sm:%s197]
                %221 = vst [vmem:[%s205 + $0x38] sm:%s197] %v220
              $region37: #{_forward.1} parent=31 // loop_footer
                %s203 = sadd.s32 1, %s199
              $region38: #{_forward.1} parent=31 // loop_footer_branch
                %198 = sbr.rel target = $region34
              $region39: #{_forward.1} parent=31 // loop_exit
                _
            $region32: #{_forward.1} parent=23 // pred_fallthru
              _
          $region24: #{_forward.1} parent=19 // pred_fallthru
            _
          %250 = vnop
        $region20: #{_forward.1} parent=15 // pred_fallthru
          _
        // Predicated region
        $region55: #{_forward.1} parent=15 // pred_check
          %p251 = pneg %p72
        $region56: #{_forward.1} parent=15 // pred_check_branch
          %253 = sbr.rel (%p251) target = $region58
        $region57: #{_forward.1} parent=15 // pred_region
          %s254 = sand.u32 %s62, 1
          %s255 = sand.u32 %s62, 1
          %s256 = smul.addr %s255, 64
          %s257 = scalar_lea.vmem [#allocation3], %s256
          %s258 = sadd.s32 %s17, %s18
          %s259 = smul.u32 4, %s258
          %s260 = smul.addr %s259, 8
          %s261 = scalar_lea.vmem %s1, %s260
          // Predicated region
          $region59: #{_forward.1} parent=57 // pred_check
            _
          $region60: #{_forward.1} parent=57 // pred_check_branch
            %263 = sbr.rel (0) target = $region62
          $region61: #{_forward.1} parent=57 // pred_region
            // Predicated region
            $region63: #{_forward.1} parent=61 // pred_check
              _
            $region64: #{_forward.1} parent=61 // pred_check_branch
              %265 = sbr.rel (0) target = $region66
            $region65: #{_forward.1} parent=61 // pred_region
              // Predicated region
              $region78: #{_forward.1} parent=65 // pred_check
                _
              $region79: #{_forward.1} parent=65 // pred_check_branch
                %295 = sbr.rel (0) target = $region81
              $region80: #{_forward.1} parent=65 // pred_region
                loop: start=0, step=1, limit=1
                $region82: #{_forward.1} parent=80 // loop_pre_header
                  _
                $region83: #{_forward.1} parent=80 // loop_header
                  %s297 = sphi 0, %s301
                  %p298 = scmp.ge.s32.totalorder %s297, 1
                  %s302 = sphi %s261, %s261
                  %s303 = sphi %s257, %s257
                $region84: #{_forward.1} parent=80 // loop_header_branch
                  %300 = sbr.rel (%p298) target = $region88
                $region85: #{_forward.1} parent=80 // loop_body
                  %v304 = vld [vmem:[%s302] sm:$0xff]
                  %305 = vst [vmem:[%s303] sm:$0xff] %v304
                  %v306 = vld [vmem:[%s302 + $0x8] sm:$0xff]
                  %307 = vst [vmem:[%s303 + $0x8] sm:$0xff] %v306
                  %v308 = vld [vmem:[%s302 + $0x10] sm:$0xff]
                  %309 = vst [vmem:[%s303 + $0x10] sm:$0xff] %v308
                  %v310 = vld [vmem:[%s302 + $0x18] sm:$0xff]
                  %311 = vst [vmem:[%s303 + $0x18] sm:$0xff] %v310
                  %v312 = vld [vmem:[%s302 + $0x40] sm:$0xff]
                  %313 = vst [vmem:[%s303 + $0x20] sm:$0xff] %v312
                  %v314 = vld [vmem:[%s302 + $0x48] sm:$0xff]
                  %315 = vst [vmem:[%s303 + $0x28] sm:$0xff] %v314
                  %v316 = vld [vmem:[%s302 + $0x50] sm:$0xff]
                  %317 = vst [vmem:[%s303 + $0x30] sm:$0xff] %v316
                  %v318 = vld [vmem:[%s302 + $0x58] sm:$0xff]
                  %319 = vst [vmem:[%s303 + $0x38] sm:$0xff] %v318
                $region86: #{_forward.1} parent=80 // loop_footer
                  %s301 = sadd.s32 1, %s297
                $region87: #{_forward.1} parent=80 // loop_footer_branch
                  %296 = sbr.rel target = $region83
                $region88: #{_forward.1} parent=80 // loop_exit
                  _
              $region81: #{_forward.1} parent=65 // pred_fallthru
                _
              // Predicated region
              $region89: #{_forward.1} parent=65 // pred_check
                _
              $region90: #{_forward.1} parent=65 // pred_check_branch
                %321 = sbr.rel target = $region92
              $region91: #{_forward.1} parent=65 // pred_region
                _
              $region92: #{_forward.1} parent=65 // pred_fallthru
                _
            $region66: #{_forward.1} parent=61 // pred_fallthru
              _
            // Predicated region
            $region67: #{_forward.1} parent=61 // pred_check
              _
            $region68: #{_forward.1} parent=61 // pred_check_branch
              %267 = sbr.rel target = $region70
            $region69: #{_forward.1} parent=61 // pred_region
              %s269 = ssub.s32 256, 1
              loop: start=0, step=1, limit=1
              $region71: #{_forward.1} parent=69 // loop_pre_header
                _
              $region72: #{_forward.1} parent=69 // loop_header
                %s271 = sphi 0, %s275
                %p272 = scmp.ge.s32.totalorder %s271, 1
                %s276 = sphi %s261, %s261
                %s277 = sphi %s257, %s257
              $region73: #{_forward.1} parent=69 // loop_header_branch
                %274 = sbr.rel (%p272) target = $region77
              $region74: #{_forward.1} parent=69 // loop_body
                %v278 = vld [vmem:[%s276] sm:%s269]
                %279 = vst [vmem:[%s277] sm:%s269] %v278
                %v280 = vld [vmem:[%s276 + $0x8] sm:%s269]
                %281 = vst [vmem:[%s277 + $0x8] sm:%s269] %v280
                %v282 = vld [vmem:[%s276 + $0x10] sm:%s269]
                %283 = vst [vmem:[%s277 + $0x10] sm:%s269] %v282
                %v284 = vld [vmem:[%s276 + $0x18] sm:%s269]
                %285 = vst [vmem:[%s277 + $0x18] sm:%s269] %v284
                %v286 = vld [vmem:[%s276 + $0x40] sm:%s269]
                %287 = vst [vmem:[%s277 + $0x20] sm:%s269] %v286
                %v288 = vld [vmem:[%s276 + $0x48] sm:%s269]
                %289 = vst [vmem:[%s277 + $0x28] sm:%s269] %v288
                %v290 = vld [vmem:[%s276 + $0x50] sm:%s269]
                %291 = vst [vmem:[%s277 + $0x30] sm:%s269] %v290
                %v292 = vld [vmem:[%s276 + $0x58] sm:%s269]
                %293 = vst [vmem:[%s277 + $0x38] sm:%s269] %v292
              $region75: #{_forward.1} parent=69 // loop_footer
                %s275 = sadd.s32 1, %s271
              $region76: #{_forward.1} parent=69 // loop_footer_branch
                %270 = sbr.rel target = $region72
              $region77: #{_forward.1} parent=69 // loop_exit
                _
            $region70: #{_forward.1} parent=61 // pred_fallthru
              _
          $region62: #{_forward.1} parent=57 // pred_fallthru
            _
          %322 = vnop
        $region58: #{_forward.1} parent=15 // pred_fallthru
          _
        // Predicated region
        $region93: #{_forward.1} parent=15 // pred_check
          %p323 = pneg %p100
        $region94: #{_forward.1} parent=15 // pred_check_branch
          %325 = sbr.rel (%p323) target = $region96
        $region95: #{_forward.1} parent=15 // pred_region
          %s326 = sadd.s32 %s17, %s18
          %s327 = smul.u32 4, %s326
          %p328 = scmp.lt.s32.totalorder %s327, 7
          %s329 = scalar_select %p328, %s327, 7
          %s330 = smul.addr %s329, 4
          %s331 = scalar_lea.vmem %s2, %s330
          %s332 = sadd.s32 %s17, %s18
          %s333 = smul.u32 4, %s332
        $region96: #{_forward.1} parent=15 // pred_fallthru
          _
        // Predicated region
        $region97: #{_forward.1} parent=15 // pred_check
          %p334 = pneg %p128
        $region98: #{_forward.1} parent=15 // pred_check_branch
          %336 = sbr.rel (%p334) target = $region100
        $region99: #{_forward.1} parent=15 // pred_region
          %s337 = sadd.s32 %s17, %s18
          %s338 = smul.u32 4, %s337
          %p339 = scmp.lt.s32.totalorder %s338, 7
          %s340 = scalar_select %p339, %s338, 7
          %s341 = smul.addr %s340, 8
          %s342 = scalar_lea.vmem %s3, %s341
          %s343 = sadd.s32 %s17, %s18
          %s344 = smul.u32 4, %s343
        $region100: #{_forward.1} parent=15 // pred_fallthru
          _
      $region16: #{_forward.1} parent=5 // pred_fallthru
        _
      %p345 = scmp.le.s32.totalorder 1, %s10
      %p346 = scmp.lt.s32.totalorder %s10, 3
      %p347 = pnand %p345, %p346
      %p348 = pneg %p347
      // Predicated region
      $region101: #{_forward.1} parent=5 // pred_check
        _
      $region102: #{_forward.1} parent=5 // pred_check_branch
        %350 = sbr.rel (%p347) target = $region104
      $region103: #{_forward.1} parent=5 // pred_region
        %s351 = ssub.s32 %s10, 1
        %s352 = sand.u32 %s37, 1
        %s353 = sand.u32 %s37, 1
        %s354 = smul.addr %s353, 64
        %s355 = scalar_lea.vmem [#allocation2], %s354
        // Predicated region
        $region105: #{_forward.1} parent=103 // pred_check
          %p356 = pneg %p50
        $region106: #{_forward.1} parent=103 // pred_check_branch
          %358 = sbr.rel (%p356) target = $region108
        $region107: #{_forward.1} parent=103 // pred_region
          _
        $region108: #{_forward.1} parent=103 // pred_fallthru
          _
        %s359 = sand.u32 %s65, 1
        %s360 = sand.u32 %s65, 1
        %s361 = smul.addr %s360, 64
        %s362 = scalar_lea.vmem [#allocation3], %s361
        // Predicated region
        $region109: #{_forward.1} parent=103 // pred_check
          %p363 = pneg %p78
        $region110: #{_forward.1} parent=103 // pred_check_branch
          %365 = sbr.rel (%p363) target = $region112
        $region111: #{_forward.1} parent=103 // pred_region
          _
        $region112: #{_forward.1} parent=103 // pred_fallthru
          _
        %s366 = sand.u32 %s37, 1
        %s367 = sand.u32 %s37, 1
        %s368 = smul.addr %s367, 64
        %s369 = scalar_lea.vmem [#allocation2], %s368
        %p370 = pneg %p50
        %p371 = pneg %p47
        %s372 = sand.u32 %s65, 1
        %s373 = sand.u32 %s65, 1
        %s374 = smul.addr %s373, 64
        %s375 = scalar_lea.vmem [#allocation3], %s374
        %p376 = pneg %p78
        %p377 = pneg %p75
        %s378 = sadd.s32 %s19, %s20
        %s379 = smul.u32 4, %s378
        %p380 = scmp.lt.s32.totalorder %s379, 7
        %s381 = scalar_select %p380, %s379, 7
        %s382 = smul.addr %s381, 4
        %s383 = scalar_lea.vmem %s2, %s382
        %p384 = pneg %p106
        %p385 = pneg %p103
        %s386 = sadd.s32 %s19, %s20
        %s387 = smul.u32 4, %s386
        %p388 = scmp.lt.s32.totalorder %s387, 7
        %s389 = scalar_select %p388, %s387, 7
        %s390 = smul.addr %s389, 8
        %s391 = scalar_lea.vmem %s3, %s390
        %p392 = pneg %p134
        %p393 = pneg %p131
        %p394 = pneg %p160
        %p395 = pneg %p157
        %p396 = scmp.lt.s32.totalorder %s19, 1
        %s397 = scalar_select %p396, %s19, 1
        %s398 = smul.addr %s397, 2
        %s399 = smul.addr %s398, 8
        %s400 = scalar_lea.vmem %s4, %s399
        %s401 = sadd.s32 %s19, %s20
        %s402 = smul.u32 4, %s401
        %s403 = sadd.s32 %s19, %s20
        %s404 = smul.u32 4, %s403
        %s405 = sadd.s32 %s19, %s20
        %s406 = smul.u32 4, %s405
        %p407 = scmp.lt.s32.totalorder %s406, 7
        %s408 = scalar_select %p407, %s406, 7
        %s409 = smul.addr %s408, 4
        %s410 = scalar_lea.vmem %s2, %s409
        %s411 = sadd.s32 %s19, %s20
        %s412 = smul.u32 4, %s411
        %s413 = sadd.s32 %s19, %s20
        %s414 = smul.u32 4, %s413
        %p415 = scmp.lt.s32.totalorder %s414, 7
        %s416 = scalar_select %p415, %s414, 7
        %s417 = smul.addr %s416, 8
        %s418 = scalar_lea.vmem %s3, %s417
        %s419 = sadd.s32 %s19, %s20
        %s420 = smul.u32 4, %s419
        %p421 = scmp.lt.s32.totalorder %s19, 1
        %s422 = scalar_select %p421, %s19, 1
        %s423 = smul.addr %s422, 2
        %s424 = smul.addr %s423, 8
        %s425 = scalar_lea.vmem %s4, %s424
        %p426 = scmp.eq.s32.totalorder %s20, 0
        // Predicated region
        $region113: #{_forward.1} parent=103 // pred_check
          %p427 = pneg %p426
        $region114: #{_forward.1} parent=103 // pred_check_branch
          %429 = sbr.rel (%p427) target = $region116
        $region115: #{_forward.1} parent=103 // pred_region
          %430 = vst [vmem:[%s425] sm:$0xff] 0.0
          %431 = vst [vmem:[%s425 + $0x8] sm:$0xff] 0.0
        $region116: #{_forward.1} parent=103 // pred_fallthru
          _
        %v432 = vld [vmem:[%s355] sm:$0xff]
        %v433 = vld [vmem:[%s355 + $0x8] sm:$0xff]
        %v434 = vld [vmem:[%s355 + $0x10] sm:$0xff]
        %v435 = vld [vmem:[%s355 + $0x18] sm:$0xff]
        %v436 = vld [vmem:[%s355 + $0x20] sm:$0xff]
        %v437 = vld [vmem:[%s355 + $0x28] sm:$0xff]
        %v438 = vld [vmem:[%s355 + $0x30] sm:$0xff]
        %v439 = vld [vmem:[%s355 + $0x38] sm:$0xff]
        %v440 = vld [vmem:[%s362] sm:$0xff]
        %v441 = vld [vmem:[%s362 + $0x8] sm:$0xff]
        %v442 = vld [vmem:[%s362 + $0x10] sm:$0xff]
        %v443 = vld [vmem:[%s362 + $0x18] sm:$0xff]
        %v444 = vld [vmem:[%s362 + $0x20] sm:$0xff]
        %v445 = vld [vmem:[%s362 + $0x28] sm:$0xff]
        %v446 = vld [vmem:[%s362 + $0x30] sm:$0xff]
        %v447 = vld [vmem:[%s362 + $0x38] sm:$0xff]
        %v448 = vld [vmem:[%s410] sm:$0xf]
        %v449 = vld [vmem:[%s410 + $0x4] sm:$0xf]
        %v450 = vld [vmem:[%s410 + $0x8] sm:$0xf]
        %v451 = vld [vmem:[%s410 + $0xc] sm:$0xf]
        %v452 = vunpack.c.l.bf16 %v448
        %v453 = vunpack.c.l.bf16 %v449
        %v454 = vunpack.c.l.bf16 %v450
        %v455 = vunpack.c.l.bf16 %v451
        %v456 = vld [vmem:[%s418] sm:$0xff]
        %v457 = vld [vmem:[%s418 + $0x8] sm:$0xff]
        %v458 = vld [vmem:[%s418 + $0x10] sm:$0xff]
        %v459 = vld [vmem:[%s418 + $0x18] sm:$0xff]
        %461 = vset.pattern.permute.xlu0 0
        %462 = vperm.xlu0 %461, %v456
        %v463 = vpop.permute.xlu0 %462
        %466 = vset.pattern.permute.xlu0 0
        %467 = vperm.xlu0 %466, %v457
        %v468 = vpop.permute.xlu0 %467
        %471 = vset.pattern.permute.xlu0 0
        %472 = vperm.xlu0 %471, %v458
        %v473 = vpop.permute.xlu0 %472
        %476 = vset.pattern.permute.xlu0 0
        %477 = vperm.xlu0 %476, %v459
        %v478 = vpop.permute.xlu0 %477
        %v480 = vmul.f32 %v452, %v463
        %v481 = vmul.f32 %v453, %v468
        %v482 = vmul.f32 %v454, %v473
        %v483 = vmul.f32 %v455, %v478
        %v484 = vsub.f32 %v440, %v432
        %v485 = vsub.f32 %v441, %v433
        %v486 = vsub.f32 %v442, %v434
        %v487 = vsub.f32 %v443, %v435
        %v488 = vsub.f32 %v444, %v436
        %v489 = vsub.f32 %v445, %v437
        %v490 = vsub.f32 %v446, %v438
        %v491 = vsub.f32 %v447, %v439
        %v492 = vmul.f32 %v480, %v484
        %v493 = vmul.f32 %v481, %v485
        %v494 = vmul.f32 %v482, %v486
        %v495 = vmul.f32 %v483, %v487
        %v496 = vmul.f32 %v480, %v488
        %v497 = vmul.f32 %v481, %v489
        %v498 = vmul.f32 %v482, %v490
        %v499 = vmul.f32 %v483, %v491
        %v500 = vmul.f32 %v492, %v484
        %v501 = vmul.f32 %v493, %v485
        %v502 = vmul.f32 %v494, %v486
        %v503 = vmul.f32 %v495, %v487
        %v504 = vmul.f32 %v496, %v488
        %v505 = vmul.f32 %v497, %v489
        %v506 = vmul.f32 %v498, %v490
        %v507 = vmul.f32 %v499, %v491
        %v508 = vadd.f32 %v500, %v501
        %v509 = vadd.f32 %v508, %v502
        %v510 = vadd.f32 %v509, %v503
        %v511 = vadd.f32 %v504, %v505
        %v512 = vadd.f32 %v511, %v506
        %v513 = vadd.f32 %v512, %v507
        %v514 = vld [vmem:[%s425] sm:$0xff]
        %v515 = vld [vmem:[%s425 + $0x8] sm:$0xff]
        %v516 = vadd.f32 %v514, %v510
        %v517 = vadd.f32 %v515, %v513
        %518 = vst [vmem:[%s425] sm:$0xff] %v516
        %519 = vst [vmem:[%s425 + $0x8] sm:$0xff] %v517
        %p520 = scmp.lt.s32.totalorder %s19, 1
        %s521 = scalar_select %p520, %s19, 1
        %s522 = smul.addr %s521, 2
        %s523 = smul.addr %s522, 8
        %s524 = scalar_lea.vmem %s4, %s523
        // Predicated region
        $region117: #{_forward.1} parent=103 // pred_check
          %p525 = pneg %p157
        $region118: #{_forward.1} parent=103 // pred_check_branch
          %527 = sbr.rel (%p525) target = $region120
        $region119: #{_forward.1} parent=103 // pred_region
          _
        $region120: #{_forward.1} parent=103 // pred_fallthru
          _
      $region104: #{_forward.1} parent=5 // pred_fallthru
        _
      %p528 = scmp.le.s32.totalorder 2, %s10
      // Predicated region
      $region121: #{_forward.1} parent=5 // pred_check
        %p529 = pneg %p528
      $region122: #{_forward.1} parent=5 // pred_check_branch
        %531 = sbr.rel (%p529) target = $region124
      $region123: #{_forward.1} parent=5 // pred_region
        %s532 = ssub.s32 %s10, 2
        // Predicated region
        $region125: #{_forward.1} parent=123 // pred_check
          %p533 = pneg %p163
        $region126: #{_forward.1} parent=123 // pred_check_branch
          %535 = sbr.rel (%p533) target = $region128
        $region127: #{_forward.1} parent=123 // pred_region
          %p536 = scmp.lt.s32.totalorder %s21, 1
          %s537 = scalar_select %p536, %s21, 1
          %s538 = smul.addr %s537, 2
          %s539 = smul.addr %s538, 8
          %s540 = scalar_lea.vmem %s4, %s539
        $region128: #{_forward.1} parent=123 // pred_fallthru
          _
      $region124: #{_forward.1} parent=5 // pred_fallthru
        _
    $region6: #{_forward.1} parent=1 // loop_footer
      %s14 = sadd.s32 1, %s10
    $region7: #{_forward.1} parent=1 // loop_footer_branch
      %9 = sbr.rel target = $region3
    $region8: #{_forward.1} parent=1 // loop_exit
      _

</llo_original>
